<compile_context>
chip_gen: v7x
topology: tpu7x:2x2x1
jax: 0.10.0
libtpu: 0.0.40
codegen_flags: <defaults>
</compile_context>

<pallas_src>
import jax
import jax.numpy as jnp
from jax.experimental import pallas as pl
from jax.experimental.pallas import tpu as pltpu


def _round_up(n, m):
    return ((n + m - 1) // m) * m


# ---------------------------------------------------------------------------
# Kernel: one (row-tile, hidden-tile) grid step of  y = relu(x@W1+b1)@W2+b2
# ---------------------------------------------------------------------------
def _mlp_kernel(x_ref, w1_ref, b1_ref, w2_ref, b2_ref, out_ref, acc_ref):
    k = pl.program_id(1)                       # hidden (reduction) axis, last

    @pl.when(k == 0)
    def _init():
        acc_ref[...] = jnp.zeros_like(acc_ref)

    # fc1 tile: native-dtype operands on the MXU, f32 accumulation.
    h = jnp.dot(x_ref[...], w1_ref[...], preferred_element_type=jnp.float32)
    h = jnp.maximum(h + b1_ref[...].astype(jnp.float32), 0.0)   # bias + ReLU

    # fc2 partial product, accumulated over hidden tiles in f32 scratch.
    acc_ref[...] += jnp.dot(h.astype(w2_ref.dtype), w2_ref[...],
                            preferred_element_type=jnp.float32)

    @pl.when(k == pl.num_programs(1) - 1)
    def _finalize():
        out_ref[...] = (acc_ref[...]
                        + b2_ref[...].astype(jnp.float32)).astype(out_ref.dtype)


# ---------------------------------------------------------------------------
# VMEM budgeting / tile selection
# ---------------------------------------------------------------------------
def _vmem_budget_bytes():
    """~75% of per-TensorCore VMEM (v5e/v6e -> ~96 MiB, v7x -> ~48 MiB)."""
    try:
        cap = pltpu.get_tpu_info().vmem_capacity_bytes
    except Exception:
        cap = 64 * 1024 * 1024          # conservative fallback
    return (cap * 3) // 4


def _footprint_bytes(tm, tk, d_in, d_out_p, isz, weight_bufs):
    """Estimated VMEM working set of one grid step."""
    return (2 * tm * d_in * isz                   # x tile (double-buffered)
            + weight_bufs * d_in * tk * isz       # W1 tile
            + weight_bufs * tk * isz              # b1 tile
            + weight_bufs * tk * d_out_p * isz    # W2 tile
            + d_out_p * isz                       # b2 (single-buffered)
            + 2 * tm * d_out_p * isz              # out tile (double-buffered)
            + tm * d_out_p * 4                    # f32 accumulator scratch
            + tm * tk * 4)                        # spilled f32 hidden activation


def _choose_hidden_tile(hidden, d_in, d_out_p, tm, isz, budget):
    # Fully-resident weights (single k step, single-buffered weight blocks)?
    if _footprint_bytes(tm, hidden, d_in, d_out_p, isz, weight_bufs=1) <= budget:
        return hidden
    for tk in (2048, 1024, 512, 256, 128):
        if tk < hidden and _footprint_bytes(tm, tk, d_in, d_out_p, isz, 2) <= budget:
            return tk
    return 128


_SUBLANE = {4: 8, 2: 16, 1: 32}


# ---------------------------------------------------------------------------
# Wrapper
# ---------------------------------------------------------------------------
def mlp_celltype(x, params, *, block_rows=512, hidden_block=None,
                 compute_dtype=None):
    """Fused MLP forward.
    x: (N, d_in). params: w1 (d_in, h)  [already the transpose of PyTorch's
    nn.Linear weight], b1 (h,) or (1, h), w2 (h, d_out), b2 (d_out,) or (1, d_out).
    """
    w1, b1 = params["w1"], params["b1"].reshape(1, -1)
    w2, b2 = params["w2"], params["b2"].reshape(1, -1)
    if compute_dtype is not None:
        # bf16 operands -> MXU fast path; accumulation stays f32 in-kernel.
        x = x.astype(compute_dtype)
        w1 = w1.astype(compute_dtype)
        w2 = w2.astype(compute_dtype)

    N, d_in = x.shape
    hidden = w1.shape[1]
    d_out = w2.shape[1]
    out_dtype = x.dtype
    isz = jnp.dtype(x.dtype).itemsize

    # Lane-dense output: pad d_out to a multiple of 128 (zero cols, sliced off).
    d_out_p = _round_up(d_out, 128)
    if d_out_p != d_out:
        w2 = jnp.pad(w2, ((0, 0), (0, d_out_p - d_out)))
        b2 = jnp.pad(b2, ((0, 0), (0, d_out_p - d_out)))

    # Row tile: dtype-aware sublane multiple, capped at block_rows.
    sub = _SUBLANE.get(isz, 8)
    tm = min(_round_up(block_rows, sub), _round_up(N, sub))

    # Hidden (reduction) tile chosen against the generation-aware VMEM budget.
    budget = int(_vmem_budget_bytes())
    tk = hidden_block if hidden_block is not None else _choose_hidden_tile(
        hidden, d_in, d_out_p, tm, isz, budget)
    hidden_p = _round_up(hidden, tk)
    if hidden_p != hidden:
        # Zero-padded hidden units: relu(0)=0 and zero W2 rows contribute nothing.
        w1 = jnp.pad(w1, ((0, 0), (0, hidden_p - hidden)))
        b1 = jnp.pad(b1, ((0, 0), (0, hidden_p - hidden)))
        w2 = jnp.pad(w2, ((0, hidden_p - hidden), (0, 0)))

    n_k = hidden_p // tk
    n_i = pl.cdiv(N, tm)            # partial last row block masked by Pallas

    weight_bytes = (w1.size + b1.size + w2.size + b2.size) * isz
    cost = pl.CostEstimate(
        flops=2 * N * (d_in * hidden_p + hidden_p * d_out_p),
        transcendentals=0,
        bytes_accessed=int(x.size * isz + n_i * weight_bytes + N * d_out_p * isz),
    )

    def _call(single_buffer_const_blocks):
        def wspec(shape, index_map, const):
            if const and single_buffer_const_blocks:
                return pl.BlockSpec(shape, index_map,
                                    pipeline_mode=pl.Buffered(1))
            return pl.BlockSpec(shape, index_map)

        wconst = (n_k == 1)   # weight blocks are constant only with one k step
        in_specs = [
            pl.BlockSpec((tm, d_in), lambda i, k: (i, 0)),        # x row tile
            wspec((d_in, tk), lambda i, k: (0, k), wconst),       # W1
            wspec((1, tk), lambda i, k: (0, k), wconst),          # b1
            wspec((tk, d_out_p), lambda i, k: (k, 0), wconst),    # W2
            wspec((1, d_out_p), lambda i, k: (0, 0), True),       # b2 (const)
        ]
        return pl.pallas_call(
            _mlp_kernel,
            out_shape=jax.ShapeDtypeStruct((N, d_out_p), out_dtype),
            grid=(n_i, n_k),
            in_specs=in_specs,
            out_specs=pl.BlockSpec((tm, d_out_p), lambda i, k: (i, 0)),
            scratch_shapes=[pltpu.VMEM((tm, d_out_p), jnp.float32)],
            compiler_params=pltpu.CompilerParams(
                dimension_semantics=("parallel", "arbitrary"),
                vmem_limit_bytes=budget,
            ),
            cost_estimate=cost,
        )(x, w1, b1, w2, b2)

    try:
        out = jax.block_until_ready(_call(True))
    except Exception:
        # Fallback if this JAX build rejects Buffered(1) single-buffering.
        out = _call(False)

    return out[:, :d_out] if d_out_p != d_out else out


# ---------------------------------------------------------------------------
# Reference + params
# ---------------------------------------------------------------------------
def _reference(x, params):
    """Pure-JAX mirror of the PyTorch forward."""
    h = jnp.maximum(x @ params["w1"] + params["b1"].reshape(1, -1), 0.0)
    return h @ params["w2"] + params["b2"].reshape(1, -1)


def init_params(key, d_in, hidden, d_out):
    ks = jax.random.split(key, 4)
    n = lambda k, s: jax.random.normal(k, s, dtype=jnp.float32) * 0.1
    return {
        # Stored as (in, out) == transposed nn.Linear weight -> plain x @ W.
        "w1": n(ks[0], (d_in, hidden)),
        "b1": n(ks[1], (1, hidden)),
        "w2": n(ks[2], (hidden, d_out)),
        "b2": n(ks[3], (1, d_out)),
    }


if __name__ == "__main__":
    key = jax.random.PRNGKey(0)
    k_x1, k_p1, k_x2, k_p2 = jax.random.split(key, 4)

    # 1) Small f32 case: single hidden tile -> fully fused monolithic path.
    N, d_in, hidden, d_out = 8, 32, 64, 16
    x = jax.random.normal(k_x1, (N, d_in), dtype=jnp.float32)
    params = init_params(k_p1, d_in, hidden, d_out)
    out = jax.block_until_ready(mlp_celltype(x, params))
    ref = _reference(x, params)
    assert out.shape == (N, d_out)
    assert jnp.allclose(out, ref, rtol=1e-4, atol=1e-4), "f32 monolithic mismatch"

    # 2) Force the hidden-reduction (k-tiled) path used for large weights.
    N2, d_in2, hidden2, d_out2 = 24, 128, 256, 48
    x2 = jax.random.normal(k_x2, (N2, d_in2), dtype=jnp.float32)
    params2 = init_params(k_p2, d_in2, hidden2, d_out2)
    out2 = jax.block_until_ready(mlp_celltype(x2, params2, hidden_block=128))
    ref2 = _reference(x2, params2)
    assert out2.shape == (N2, d_out2)
    assert jnp.allclose(out2, ref2, rtol=1e-4, atol=1e-4), "f32 k-tiled mismatch"

    # 3) bf16 MXU fast path (native bf16 operands, f32 accumulation).
    out3 = jax.block_until_ready(
        mlp_celltype(x2, params2, compute_dtype=jnp.bfloat16))
    assert out3.shape == (N2, d_out2)
    assert jnp.allclose(out3.astype(jnp.float32), ref2,
                        rtol=5e-2, atol=5e-2), "bf16 mismatch"

    print("KERNEL_OK")
</pallas_src>

<mosaic_0001>
module attributes {stable_mosaic.version = 11 : i64} {
  func.func @_mlp_kernel(%arg0: i32, %arg1: i32, %arg2: memref<8x32xf32, #tpu.memory_space<vmem>>, %arg3: memref<32x64xf32, #tpu.memory_space<vmem>>, %arg4: memref<1x64xf32, #tpu.memory_space<vmem>>, %arg5: memref<64x128xf32, #tpu.memory_space<vmem>>, %arg6: memref<1x128xf32, #tpu.memory_space<vmem>>, %arg7: memref<8x128xf32, #tpu.memory_space<vmem>>, %arg8: memref<8x128xf32, #tpu.memory_space<vmem>>) attributes {dimension_semantics = [#tpu.dimension_semantics<parallel>, #tpu.dimension_semantics<arbitrary>], iteration_bounds = array<i64: 1, 1>, scalar_prefetch = 0 : i64, scratch_operands = 1 : i64, tpu.core_type = #tpu.core_type<tc>, window_params = [{transform_indices = @transform_0, window_bounds = array<i64: 8, 32>}, {pipeline_mode = #tpu.pipeline_mode<synchronous>, transform_indices = @transform_1, window_bounds = array<i64: 32, 64>}, {pipeline_mode = #tpu.pipeline_mode<synchronous>, transform_indices = @transform_2, window_bounds = array<i64: 1, 64>}, {pipeline_mode = #tpu.pipeline_mode<synchronous>, transform_indices = @transform_3, window_bounds = array<i64: 64, 128>}, {pipeline_mode = #tpu.pipeline_mode<synchronous>, transform_indices = @transform_4, window_bounds = array<i64: 1, 128>}, {transform_indices = @transform_5, window_bounds = array<i64: 8, 128>}]} {
    %c0_i32 = arith.constant 0 : i32
    %0 = arith.cmpi eq, %arg1, %c0_i32 : i32
    %1 = arith.extui %0 : i1 to i32
    %c0_i32_0 = arith.constant 0 : i32
    %2 = arith.cmpi ne, %1, %c0_i32_0 : i32
    scf.if %2 {
      %cst_16 = arith.constant 0.000000e+00 : f32
      %19 = vector.broadcast %cst_16 : f32 to vector<8x128xf32>
      %c0_17 = arith.constant 0 : index
      %c0_18 = arith.constant 0 : index
      %20 = vector.load %arg8[%c0_17, %c0_18] : memref<8x128xf32, #tpu.memory_space<vmem>>, vector<8x128xf32>
      tpu.vector_store %arg8[%c0_17, %c0_18], %19 {strides = array<i32>} : memref<8x128xf32, #tpu.memory_space<vmem>>, vector<8x128xf32>,
    } else {
    }
    %c0 = arith.constant 0 : index
    %c0_1 = arith.constant 0 : index
    %3 = vector.load %arg2[%c0, %c0_1] : memref<8x32xf32, #tpu.memory_space<vmem>>, vector<8x32xf32>
    %c0_2 = arith.constant 0 : index
    %c0_3 = arith.constant 0 : index
    %4 = vector.load %arg3[%c0_2, %c0_3] : memref<32x64xf32, #tpu.memory_space<vmem>>, vector<32x64xf32>
    %cst = arith.constant dense<0.000000e+00> : vector<8x64xf32>
    %5 = tpu.matmul %3, %4, %cst {dimension_numbers = #tpu.dot_dimension_numbers<[1], [0], [0], [1], [0, 0, 1, 1], [], []>} : vector<8x32xf32>, vector<32x64xf32>, vector<8x64xf32> -> vector<8x64xf32>
    %c0_4 = arith.constant 0 : index
    %c0_5 = arith.constant 0 : index
    %6 = vector.load %arg4[%c0_4, %c0_5] : memref<1x64xf32, #tpu.memory_space<vmem>>, vector<1x64xf32>
    %7 = vector.broadcast %6 : vector<1x64xf32> to vector<8x64xf32>
    %8 = arith.addf %5, %7 : vector<8x64xf32>
    %cst_6 = arith.constant 0.000000e+00 : f32
    %9 = vector.broadcast %cst_6 : f32 to vector<8x64xf32>
    %10 = arith.maximumf %8, %9 : vector<8x64xf32>
    %c0_7 = arith.constant 0 : index
    %c0_8 = arith.constant 0 : index
    %11 = vector.load %arg8[%c0_7, %c0_8] : memref<8x128xf32, #tpu.memory_space<vmem>>, vector<8x128xf32>
    %c0_9 = arith.constant 0 : index
    %c0_10 = arith.constant 0 : index
    %12 = vector.load %arg5[%c0_9, %c0_10] : memref<64x128xf32, #tpu.memory_space<vmem>>, vector<64x128xf32>
    %cst_11 = arith.constant dense<0.000000e+00> : vector<8x128xf32>
    %13 = tpu.matmul %10, %12, %cst_11 {dimension_numbers = #tpu.dot_dimension_numbers<[1], [0], [0], [1], [0, 0, 1, 1], [], []>} : vector<8x64xf32>, vector<64x128xf32>, vector<8x128xf32> -> vector<8x128xf32>
    %14 = arith.addf %11, %13 : vector<8x128xf32>
    %c0_12 = arith.constant 0 : index
    %c0_13 = arith.constant 0 : index
    %15 = vector.load %arg8[%c0_12, %c0_13] : memref<8x128xf32, #tpu.memory_space<vmem>>, vector<8x128xf32>
    tpu.vector_store %arg8[%c0_12, %c0_13], %14 {strides = array<i32>} : memref<8x128xf32, #tpu.memory_space<vmem>>, vector<8x128xf32>,
    %c0_i32_14 = arith.constant 0 : i32
    %16 = arith.cmpi eq, %arg1, %c0_i32_14 : i32
    %17 = arith.extui %16 : i1 to i32
    %c0_i32_15 = arith.constant 0 : i32
    %18 = arith.cmpi ne, %17, %c0_i32_15 : i32
    scf.if %18 {
      %c0_16 = arith.constant 0 : index
      %c0_17 = arith.constant 0 : index
      %19 = vector.load %arg8[%c0_16, %c0_17] : memref<8x128xf32, #tpu.memory_space<vmem>>, vector<8x128xf32>
      %c0_18 = arith.constant 0 : index
      %c0_19 = arith.constant 0 : index
      %20 = vector.load %arg6[%c0_18, %c0_19] : memref<1x128xf32, #tpu.memory_space<vmem>>, vector<1x128xf32>
      %21 = vector.broadcast %20 : vector<1x128xf32> to vector<8x128xf32>
      %22 = arith.addf %19, %21 : vector<8x128xf32>
      %c0_20 = arith.constant 0 : index
      %c0_21 = arith.constant 0 : index
      %23 = vector.load %arg7[%c0_20, %c0_21] : memref<8x128xf32, #tpu.memory_space<vmem>>, vector<8x128xf32>
      tpu.vector_store %arg7[%c0_20, %c0_21], %22 {strides = array<i32>} : memref<8x128xf32, #tpu.memory_space<vmem>>, vector<8x128xf32>,
    } else {
    }
    return
  }
  func.func @transform_0(%arg0: i32, %arg1: i32) -> (i32, i32) {
    %c0_i32 = arith.constant 0 : i32
    %c0_i32_0 = arith.constant 0 : i32
    return %arg0, %c0_i32 : i32, i32
  }
  func.func @transform_1(%arg0: i32, %arg1: i32) -> (i32, i32) {
    %c0_i32 = arith.constant 0 : i32
    %c0_i32_0 = arith.constant 0 : i32
    return %c0_i32, %arg1 : i32, i32
  }
  func.func @transform_2(%arg0: i32, %arg1: i32) -> (i32, i32) {
    %c0_i32 = arith.constant 0 : i32
    %c0_i32_0 = arith.constant 0 : i32
    return %c0_i32, %arg1 : i32, i32
  }
  func.func @transform_3(%arg0: i32, %arg1: i32) -> (i32, i32) {
    %c0_i32 = arith.constant 0 : i32
    %c0_i32_0 = arith.constant 0 : i32
    return %arg1, %c0_i32 : i32, i32
  }
  func.func @transform_4(%arg0: i32, %arg1: i32) -> (i32, i32) {
    %c0_i32 = arith.constant 0 : i32
    %c0_i32_0 = arith.constant 0 : i32
    %c0_i32_1 = arith.constant 0 : i32
    return %c0_i32, %c0_i32_0 : i32, i32
  }
  func.func @transform_5(%arg0: i32, %arg1: i32) -> (i32, i32) {
    %c0_i32 = arith.constant 0 : i32
    %c0_i32_0 = arith.constant 0 : i32
    return %arg0, %c0_i32 : i32, i32
  }
}

module attributes {stable_mosaic.version = 11 : i64} {
  func.func @_mlp_kernel(%arg0: i32, %arg1: i32, %arg2: memref<8x32xf32, #tpu.memory_space<vmem>>, %arg3: memref<32x64xf32, #tpu.memory_space<vmem>>, %arg4: memref<1x64xf32, #tpu.memory_space<vmem>>, %arg5: memref<64x128xf32, #tpu.memory_space<vmem>>, %arg6: memref<1x128xf32, #tpu.memory_space<vmem>>, %arg7: memref<8x128xf32, #tpu.memory_space<vmem>>, %arg8: memref<8x128xf32, #tpu.memory_space<vmem>>) attributes {dimension_semantics = [#tpu.dimension_semantics<parallel>, #tpu.dimension_semantics<arbitrary>], iteration_bounds = array<i64: 1, 1>, scalar_prefetch = 0 : i64, scratch_operands = 1 : i64, tpu.core_type = #tpu.core_type<tc>, window_params = [{transform_indices = @transform_0, window_bounds = array<i64: 8, 32>}, {transform_indices = @transform_1, window_bounds = array<i64: 32, 64>}, {transform_indices = @transform_2, window_bounds = array<i64: 1, 64>}, {transform_indices = @transform_3, window_bounds = array<i64: 64, 128>}, {pipeline_mode = #tpu.pipeline_mode<synchronous>, transform_indices = @transform_4, window_bounds = array<i64: 1, 128>}, {transform_indices = @transform_5, window_bounds = array<i64: 8, 128>}]} {
    %c0_i32 = arith.constant 0 : i32
    %0 = arith.cmpi eq, %arg1, %c0_i32 : i32
    %1 = arith.extui %0 : i1 to i32
    %c0_i32_0 = arith.constant 0 : i32
    %2 = arith.cmpi ne, %1, %c0_i32_0 : i32
    scf.if %2 {
      %cst_16 = arith.constant 0.000000e+00 : f32
      %19 = vector.broadcast %cst_16 : f32 to vector<8x128xf32>
      %c0_17 = arith.constant 0 : index
      %c0_18 = arith.constant 0 : index
      %20 = vector.load %arg8[%c0_17, %c0_18] : memref<8x128xf32, #tpu.memory_space<vmem>>, vector<8x128xf32>
      tpu.vector_store %arg8[%c0_17, %c0_18], %19 {strides = array<i32>} : memref<8x128xf32, #tpu.memory_space<vmem>>, vector<8x128xf32>,
    } else {
    }
    %c0 = arith.constant 0 : index
    %c0_1 = arith.constant 0 : index
    %3 = vector.load %arg2[%c0, %c0_1] : memref<8x32xf32, #tpu.memory_space<vmem>>, vector<8x32xf32>
    %c0_2 = arith.constant 0 : index
    %c0_3 = arith.constant 0 : index
    %4 = vector.load %arg3[%c0_2, %c0_3] : memref<32x64xf32, #tpu.memory_space<vmem>>, vector<32x64xf32>
    %cst = arith.constant dense<0.000000e+00> : vector<8x64xf32>
    %5 = tpu.matmul %3, %4, %cst {dimension_numbers = #tpu.dot_dimension_numbers<[1], [0], [0], [1], [0, 0, 1, 1], [], []>} : vector<8x32xf32>, vector<32x64xf32>, vector<8x64xf32> -> vector<8x64xf32>
    %c0_4 = arith.constant 0 : index
    %c0_5 = arith.constant 0 : index
    %6 = vector.load %arg4[%c0_4, %c0_5] : memref<1x64xf32, #tpu.memory_space<vmem>>, vector<1x64xf32>
    %7 = vector.broadcast %6 : vector<1x64xf32> to vector<8x64xf32>
    %8 = arith.addf %5, %7 : vector<8x64xf32>
    %cst_6 = arith.constant 0.000000e+00 : f32
    %9 = vector.broadcast %cst_6 : f32 to vector<8x64xf32>
    %10 = arith.maximumf %8, %9 : vector<8x64xf32>
    %c0_7 = arith.constant 0 : index
    %c0_8 = arith.constant 0 : index
    %11 = vector.load %arg8[%c0_7, %c0_8] : memref<8x128xf32, #tpu.memory_space<vmem>>, vector<8x128xf32>
    %c0_9 = arith.constant 0 : index
    %c0_10 = arith.constant 0 : index
    %12 = vector.load %arg5[%c0_9, %c0_10] : memref<64x128xf32, #tpu.memory_space<vmem>>, vector<64x128xf32>
    %cst_11 = arith.constant dense<0.000000e+00> : vector<8x128xf32>
    %13 = tpu.matmul %10, %12, %cst_11 {dimension_numbers = #tpu.dot_dimension_numbers<[1], [0], [0], [1], [0, 0, 1, 1], [], []>} : vector<8x64xf32>, vector<64x128xf32>, vector<8x128xf32> -> vector<8x128xf32>
    %14 = arith.addf %11, %13 : vector<8x128xf32>
    %c0_12 = arith.constant 0 : index
    %c0_13 = arith.constant 0 : index
    %15 = vector.load %arg8[%c0_12, %c0_13] : memref<8x128xf32, #tpu.memory_space<vmem>>, vector<8x128xf32>
    tpu.vector_store %arg8[%c0_12, %c0_13], %14 {strides = array<i32>} : memref<8x128xf32, #tpu.memory_space<vmem>>, vector<8x128xf32>,
    %c0_i32_14 = arith.constant 0 : i32
    %16 = arith.cmpi eq, %arg1, %c0_i32_14 : i32
    %17 = arith.extui %16 : i1 to i32
    %c0_i32_15 = arith.constant 0 : i32
    %18 = arith.cmpi ne, %17, %c0_i32_15 : i32
    scf.if %18 {
      %c0_16 = arith.constant 0 : index
      %c0_17 = arith.constant 0 : index
      %19 = vector.load %arg8[%c0_16, %c0_17] : memref<8x128xf32, #tpu.memory_space<vmem>>, vector<8x128xf32>
      %c0_18 = arith.constant 0 : index
      %c0_19 = arith.constant 0 : index
      %20 = vector.load %arg6[%c0_18, %c0_19] : memref<1x128xf32, #tpu.memory_space<vmem>>, vector<1x128xf32>
      %21 = vector.broadcast %20 : vector<1x128xf32> to vector<8x128xf32>
      %22 = arith.addf %19, %21 : vector<8x128xf32>
      %c0_20 = arith.constant 0 : index
      %c0_21 = arith.constant 0 : index
      %23 = vector.load %arg7[%c0_20, %c0_21] : memref<8x128xf32, #tpu.memory_space<vmem>>, vector<8x128xf32>
      tpu.vector_store %arg7[%c0_20, %c0_21], %22 {strides = array<i32>} : memref<8x128xf32, #tpu.memory_space<vmem>>, vector<8x128xf32>,
    } else {
    }
    return
  }
  func.func @transform_0(%arg0: i32, %arg1: i32) -> (i32, i32) {
    %c0_i32 = arith.constant 0 : i32
    %c0_i32_0 = arith.constant 0 : i32
    return %arg0, %c0_i32 : i32, i32
  }
  func.func @transform_1(%arg0: i32, %arg1: i32) -> (i32, i32) {
    %c0_i32 = arith.constant 0 : i32
    %c0_i32_0 = arith.constant 0 : i32
    return %c0_i32, %arg1 : i32, i32
  }
  func.func @transform_2(%arg0: i32, %arg1: i32) -> (i32, i32) {
    %c0_i32 = arith.constant 0 : i32
    %c0_i32_0 = arith.constant 0 : i32
    return %c0_i32, %arg1 : i32, i32
  }
  func.func @transform_3(%arg0: i32, %arg1: i32) -> (i32, i32) {
    %c0_i32 = arith.constant 0 : i32
    %c0_i32_0 = arith.constant 0 : i32
    return %arg1, %c0_i32 : i32, i32
  }
  func.func @transform_4(%arg0: i32, %arg1: i32) -> (i32, i32) {
    %c0_i32 = arith.constant 0 : i32
    %c0_i32_0 = arith.constant 0 : i32
    %c0_i32_1 = arith.constant 0 : i32
    return %c0_i32, %c0_i32_0 : i32, i32
  }
  func.func @transform_5(%arg0: i32, %arg1: i32) -> (i32, i32) {
    %c0_i32 = arith.constant 0 : i32
    %c0_i32_0 = arith.constant 0 : i32
    return %arg0, %c0_i32 : i32, i32
  }
}

</mosaic_0001>

<llo_original>
// kernel: tpu_custom_call.1
$region0: #{tpu_custom_call.1}
  #allocation0 [shape = 'u32[]', space=smem, size = 0x4, offset = 0x4, fixed_abs, tag = 'smem constant byte address 0x4 - core index']
  #allocation1 [shape = 'u32[144,128]{1,0:T(1,128)}', space=vmem, size = 0x12000, scoped, tag = 'internal scratch']
  #allocation2 [shape = 'f32[8,128]{1,0:T(8,128)}', space=vmem, size = 0x1000, scoped, tag = 'scratch operand']
  %s0 = inlined_call_operand.hbm [shape: f32[8,32], index: 0, kind: input, shape index: {}]
  %s1 = inlined_call_operand.hbm [shape: f32[32,64], index: 1, kind: input, shape index: {}]
  %s2 = inlined_call_operand.vmem [shape: f32[1,64], index: 2, kind: input, shape index: {}]
  %s3 = inlined_call_operand.hbm [shape: f32[64,128], index: 3, kind: input, shape index: {}]
  %s4 = inlined_call_operand.vmem [shape: f32[1,128], index: 4, kind: input, shape index: {}]
  %s5 = inlined_call_operand.hbm [shape: f32[8,128], index: 5, kind: output, shape index: {}]
  %s6 = sld [smem:[#allocation0]]
  $region50: #{tpu_custom_call.1} parent=0
    _
  %s8 = ssub.s32 1, %s6
  %s9 = scalar_select 0, %s8, %s6
  $region1: #{tpu_custom_call.1} parent=0
    #allocation3 [shape = 'u8[4096]{0}', space=vmem, size = 0x1000, scoped, tag = 'input window, operand 0, single buffered']
    #allocation4 [shape = 's32[1]{0}', space=sflag, size = 0x4, scoped, tag = 'scoped memory for tpu_custom_call.1']
    #allocation5 [shape = 's32[1]{0}', space=sflag, size = 0x4, scoped, tag = 'scoped memory for tpu_custom_call.1']
    #allocation6 [shape = 'u8[16384]{0}', space=vmem, size = 0x4000, scoped, tag = 'input window, operand 1, single buffered']
    #allocation7 [shape = 's32[1]{0}', space=sflag, size = 0x4, scoped, tag = 'scoped memory for tpu_custom_call.1']
    #allocation8 [shape = 'u8[32768]{0}', space=vmem, size = 0x8000, scoped, tag = 'input window, operand 3, single buffered']
    #allocation9 [shape = 'u8[4096]{0}', space=vmem, size = 0x1000, scoped, tag = 'output window, operand 0, single buffered']
    %10 = vsyncpa [#allocation4], 0
    %11 = vsyncpa [#allocation7], 0
    %12 = vsyncpa [#allocation5], 0
    // Predicated region
    $region2: #{tpu_custom_call.1} parent=1 // pred_check
      _
    $region3: #{tpu_custom_call.1} parent=1 // pred_check_branch
      %14 = sbr.rel (0) target = $region5
    $region4: #{tpu_custom_call.1} parent=1 // pred_region
      %s16 = ssub.s32 128, 128
      %17 = vsyncadd [#allocation4], %s16
      %s19 = sshll.u32 [#allocation3], 4
      %s20 = int_to_ptr.vmem [resolvable:$true] %s19
      %22 = dma.hbm_to_vmem [thread:$0]  %s0, 128, %s20, [#allocation4]
    $region5: #{tpu_custom_call.1} parent=1 // pred_fallthru
      _
    // Predicated region
    $region6: #{tpu_custom_call.1} parent=1 // pred_check
      _
    $region7: #{tpu_custom_call.1} parent=1 // pred_check_branch
      %24 = sbr.rel (0) target = $region9
    $region8: #{tpu_custom_call.1} parent=1 // pred_region
      %s26 = ssub.s32 512, 512
      %27 = vsyncadd [#allocation7], %s26
      %s28 = sshll.u32 [#allocation6], 4
      %s29 = int_to_ptr.vmem [resolvable:$true] %s28
      %34 = dma.hbm_to_vmem [thread:$0]  %s1, 512, %s29, [#allocation7], 128, 128, 8
    $region9: #{tpu_custom_call.1} parent=1 // pred_fallthru
      _
    // Predicated region
    $region10: #{tpu_custom_call.1} parent=1 // pred_check
      _
    $region11: #{tpu_custom_call.1} parent=1 // pred_check_branch
      %36 = sbr.rel (0) target = $region13
    $region12: #{tpu_custom_call.1} parent=1 // pred_region
      _
    $region13: #{tpu_custom_call.1} parent=1 // pred_fallthru
      _
    // Predicated region
    $region14: #{tpu_custom_call.1} parent=1 // pred_check
      _
    $region15: #{tpu_custom_call.1} parent=1 // pred_check_branch
      %38 = sbr.rel (0) target = $region17
    $region16: #{tpu_custom_call.1} parent=1 // pred_region
      %s40 = ssub.s32 1024, 1024
      %41 = vsyncadd [#allocation7], %s40
      %s42 = sshll.u32 [#allocation8], 4
      %s43 = int_to_ptr.vmem [resolvable:$true] %s42
      %48 = dma.hbm_to_vmem [thread:$0]  %s3, 1024, %s43, [#allocation7], 128, 128, 8
    $region17: #{tpu_custom_call.1} parent=1 // pred_fallthru
      _
    // Predicated region
    $region18: #{tpu_custom_call.1} parent=1 // pred_check
      _
    $region19: #{tpu_custom_call.1} parent=1 // pred_check_branch
      %50 = sbr.rel (0) target = $region21
    $region20: #{tpu_custom_call.1} parent=1 // pred_region
      _
    $region21: #{tpu_custom_call.1} parent=1 // pred_fallthru
      _
    // Predicated region
    $region22: #{tpu_custom_call.1} parent=1 // pred_check
      _
    $region23: #{tpu_custom_call.1} parent=1 // pred_check_branch
      %52 = sbr.rel (0) target = $region25
    $region24: #{tpu_custom_call.1} parent=1 // pred_region
      %53 = dma.done [#allocation4], 128
    $region25: #{tpu_custom_call.1} parent=1 // pred_fallthru
      _
    // Predicated region
    $region26: #{tpu_custom_call.1} parent=1 // pred_check
      _
    $region27: #{tpu_custom_call.1} parent=1 // pred_check_branch
      %55 = sbr.rel (0) target = $region29
    $region28: #{tpu_custom_call.1} parent=1 // pred_region
      %56 = dma.done [#allocation7], 512
    $region29: #{tpu_custom_call.1} parent=1 // pred_fallthru
      _
    // Predicated region
    $region30: #{tpu_custom_call.1} parent=1 // pred_check
      _
    $region31: #{tpu_custom_call.1} parent=1 // pred_check_branch
      %58 = sbr.rel (0) target = $region33
    $region32: #{tpu_custom_call.1} parent=1 // pred_region
      %59 = dma.done [#allocation7], 1024
    $region33: #{tpu_custom_call.1} parent=1 // pred_fallthru
      _
    %p60 = scmp.eq.s32.totalorder 0, 0
    // Predicated region
    $region34: #{tpu_custom_call.1} parent=1 // pred_check
      %p61 = pneg %p60
    $region35: #{tpu_custom_call.1} parent=1 // pred_check_branch
      %63 = sbr.rel (%p61) target = $region37
    $region36: #{tpu_custom_call.1} parent=1 // pred_region
      %64 = vst [vmem:[#allocation2] sm:$0xff] 0.0
    $region37: #{tpu_custom_call.1} parent=1 // pred_fallthru
      _
    %v65 = vld [vmem:[#allocation3] sm:$0xff]
    %v66 = vld [vmem:[#allocation6] sm:$0xff]
    %v67 = vld [vmem:[#allocation6 + $0x8] sm:$0xff]
    %v68 = vld [vmem:[#allocation6 + $0x10] sm:$0xff]
    %v69 = vld [vmem:[#allocation6 + $0x18] sm:$0xff]
    %v70 = vld [vmem:[%s2] sm:$0x1]
    %v72 = vlaneseq
    %v73 = vshrl.u32 %v72, 7
    %v74 = vsub.s32 0, %v73
    %v75 = vrot.slane %v70, %v74
    %vm77 = vcmask 261120
    %v79 = vsel %vm77, %v65, 0
    %81 = vmatprep.subr.mxu0 0.0
    %82 = vmatpush1.msra.mxu0 %v66
    %83 = vmatprep.subr.mxu0 0.0
    %84 = vmatpush1.msra.mxu0 %v67
    %85 = vmatprep.subr.mxu0 0.0
    %86 = vmatpush1.msra.mxu0 %v68
    %87 = vmatprep.subr.mxu0 0.0
    %88 = vmatpush1.msra.mxu0 %v69
    %89 = vmatprep.subr.mxu0 0.0
    %90 = vmatpush1.msra.mxu0 0.0
    %91 = vmatprep.subr.mxu0 0.0
    %92 = vmatpush1.msra.mxu0 0.0
    %93 = vmatprep.subr.mxu0 0.0
    %94 = vmatpush1.msra.mxu0 0.0
    %95 = vmatprep.subr.mxu0 0.0
    %96 = vmatpush1.msra.mxu0 0.0
    %97 = vmatprep.subr.mxu0 0.0
    %98 = vmatpush1.msra.mxu0 0.0
    %99 = vmatprep.subr.mxu0 0.0
    %100 = vmatpush1.msra.mxu0 0.0
    %101 = vmatprep.subr.mxu0 0.0
    %102 = vmatpush1.msra.mxu0 0.0
    %103 = vmatprep.subr.mxu0 0.0
    %104 = vmatpush1.msra.mxu0 0.0
    %105 = vmatprep.subr.mxu0 0.0
    %106 = vmatpush1.msra.mxu0 0.0
    %107 = vmatprep.subr.mxu0 0.0
    %108 = vmatpush1.msra.mxu0 0.0
    %109 = vmatprep.subr.mxu0 0.0
    %110 = vmatpush1.msra.mxu0 0.0
    %111 = vmatprep.subr.mxu0 0.0
    %112 = vmatpush1.msra.mxu0 0.0
    %113 = vmatprep.subr.mxu0 0.0
    %114 = vmatpush1.msra.mxu0 0.0
    %115 = vmatprep.subr.mxu0 0.0
    %116 = vmatpush1.msra.mxu0 0.0
    %117 = vmatprep.subr.mxu0 0.0
    %118 = vmatpush1.msra.mxu0 0.0
    %119 = vmatprep.subr.mxu0 0.0
    %120 = vmatpush1.msra.mxu0 0.0
    %121 = vmatprep.subr.mxu0 0.0
    %122 = vmatpush1.msra.mxu0 0.0
    %123 = vmatprep.subr.mxu0 0.0
    %124 = vmatpush1.msra.mxu0 0.0
    %125 = vmatprep.subr.mxu0 0.0
    %126 = vmatpush1.msra.mxu0 0.0
    %127 = vmatprep.subr.mxu0 0.0
    %128 = vmatpush1.msra.mxu0 0.0
    %129 = vmatprep.subr.mxu0 0.0
    %130 = vmatpush1.msra.mxu0 0.0
    %131 = vmatprep.subr.mxu0 0.0
    %132 = vmatpush1.msra.mxu0 0.0
    %133 = vmatprep.subr.mxu0 0.0
    %134 = vmatpush1.msra.mxu0 0.0
    %135 = vmatprep.subr.mxu0 0.0
    %136 = vmatpush1.msra.mxu0 0.0
    %137 = vmatprep.subr.mxu0 0.0
    %138 = vmatpush1.msra.mxu0 0.0
    %139 = vmatprep.subr.mxu0 0.0
    %140 = vmatpush1.msra.mxu0 0.0
    %141 = vmatprep.subr.mxu0 0.0
    %142 = vmatpush1.msra.mxu0 0.0
    %143 = vmatprep.subr.mxu0 0.0
    %144 = vmatpush1.msra.mxu0 0.0
    %145 = vmatprep.mubr.f32.mxu0 0.0
    %146 = vmatmul.mubr.f32.gmra.mrb[0].mxu0 %v79
    %v147 = vpop.f32.mrb[0].mxu0
    %v148 = vadd.f32 %v75, %v147
    %v149 = vpop.f32.mrb[0].mxu0
    %150 = vdwg.mxu0
    %v151 = vmax.f32 %v148, 0.0
    %v152 = vld [vmem:[#allocation2] sm:$0xff]
    %v153 = vld [vmem:[#allocation8] sm:$0xff]
    %v154 = vld [vmem:[#allocation8 + $0x8] sm:$0xff]
    %v155 = vld [vmem:[#allocation8 + $0x10] sm:$0xff]
    %v156 = vld [vmem:[#allocation8 + $0x18] sm:$0xff]
    %v157 = vld [vmem:[#allocation8 + $0x20] sm:$0xff]
    %v158 = vld [vmem:[#allocation8 + $0x28] sm:$0xff]
    %v159 = vld [vmem:[#allocation8 + $0x30] sm:$0xff]
    %v160 = vld [vmem:[#allocation8 + $0x38] sm:$0xff]
    %vm161 = vcmask 523264
    %v163 = vsel %vm161, %v151, 0
    %165 = vmatprep.subr.mxu0 0.0
    %166 = vmatpush1.msra.mxu0 %v153
    %167 = vmatprep.subr.mxu0 0.0
    %168 = vmatpush1.msra.mxu0 %v154
    %169 = vmatprep.subr.mxu0 0.0
    %170 = vmatpush1.msra.mxu0 %v155
    %171 = vmatprep.subr.mxu0 0.0
    %172 = vmatpush1.msra.mxu0 %v156
    %173 = vmatprep.subr.mxu0 0.0
    %174 = vmatpush1.msra.mxu0 %v157
    %175 = vmatprep.subr.mxu0 0.0
    %176 = vmatpush1.msra.mxu0 %v158
    %177 = vmatprep.subr.mxu0 0.0
    %178 = vmatpush1.msra.mxu0 %v159
    %179 = vmatprep.subr.mxu0 0.0
    %180 = vmatpush1.msra.mxu0 %v160
    %181 = vmatprep.subr.mxu0 0.0
    %182 = vmatpush1.msra.mxu0 0.0
    %183 = vmatprep.subr.mxu0 0.0
    %184 = vmatpush1.msra.mxu0 0.0
    %185 = vmatprep.subr.mxu0 0.0
    %186 = vmatpush1.msra.mxu0 0.0
    %187 = vmatprep.subr.mxu0 0.0
    %188 = vmatpush1.msra.mxu0 0.0
    %189 = vmatprep.subr.mxu0 0.0
    %190 = vmatpush1.msra.mxu0 0.0
    %191 = vmatprep.subr.mxu0 0.0
    %192 = vmatpush1.msra.mxu0 0.0
    %193 = vmatprep.subr.mxu0 0.0
    %194 = vmatpush1.msra.mxu0 0.0
    %195 = vmatprep.subr.mxu0 0.0
    %196 = vmatpush1.msra.mxu0 0.0
    %197 = vmatprep.subr.mxu0 0.0
    %198 = vmatpush1.msra.mxu0 0.0
    %199 = vmatprep.subr.mxu0 0.0
    %200 = vmatpush1.msra.mxu0 0.0
    %201 = vmatprep.subr.mxu0 0.0
    %202 = vmatpush1.msra.mxu0 0.0
    %203 = vmatprep.subr.mxu0 0.0
    %204 = vmatpush1.msra.mxu0 0.0
    %205 = vmatprep.subr.mxu0 0.0
    %206 = vmatpush1.msra.mxu0 0.0
    %207 = vmatprep.subr.mxu0 0.0
    %208 = vmatpush1.msra.mxu0 0.0
    %209 = vmatprep.subr.mxu0 0.0
    %210 = vmatpush1.msra.mxu0 0.0
    %211 = vmatprep.subr.mxu0 0.0
    %212 = vmatpush1.msra.mxu0 0.0
    %213 = vmatprep.subr.mxu0 0.0
    %214 = vmatpush1.msra.mxu0 0.0
    %215 = vmatprep.subr.mxu0 0.0
    %216 = vmatpush1.msra.mxu0 0.0
    %217 = vmatprep.subr.mxu0 0.0
    %218 = vmatpush1.msra.mxu0 0.0
    %219 = vmatprep.subr.mxu0 0.0
    %220 = vmatpush1.msra.mxu0 0.0
    %221 = vmatprep.subr.mxu0 0.0
    %222 = vmatpush1.msra.mxu0 0.0
    %223 = vmatprep.subr.mxu0 0.0
    %224 = vmatpush1.msra.mxu0 0.0
    %225 = vmatprep.subr.mxu0 0.0
    %226 = vmatpush1.msra.mxu0 0.0
    %227 = vmatprep.subr.mxu0 0.0
    %228 = vmatpush1.msra.mxu0 0.0
    %229 = vmatprep.mubr.f32.mxu0 0.0
    %230 = vmatmul.mubr.f32.gmra.mrb[0].mxu0 %v163
    %v231 = vpop.f32.mrb[0].mxu0
    %v232 = vadd.f32 0.0, %v231
    %v233 = vpop.f32.mrb[0].mxu0
    %234 = vdwg.mxu0
    %v235 = vadd.f32 %v152, %v232
    %236 = vst [vmem:[#allocation2] sm:$0xff] %v235
    // Predicated region
    $region38: #{tpu_custom_call.1} parent=1 // pred_check
      %p237 = pneg %p60
    $region39: #{tpu_custom_call.1} parent=1 // pred_check_branch
      %239 = sbr.rel (%p237) target = $region41
    $region40: #{tpu_custom_call.1} parent=1 // pred_region
      %v240 = vld [vmem:[#allocation2] sm:$0xff]
      %v241 = vld [vmem:[%s4] sm:$0x1]
      %v243 = vlaneseq
      %v244 = vshrl.u32 %v243, 7
      %v245 = vsub.s32 0, %v244
      %v246 = vrot.slane %v241, %v245
      %v248 = vadd.f32 %v240, %v246
      %249 = vst [vmem:[#allocation9] sm:$0xff] %v248
    $region41: #{tpu_custom_call.1} parent=1 // pred_fallthru
      _
    // Predicated region
    $region42: #{tpu_custom_call.1} parent=1 // pred_check
      _
    $region43: #{tpu_custom_call.1} parent=1 // pred_check_branch
      %251 = sbr.rel (0) target = $region45
    $region44: #{tpu_custom_call.1} parent=1 // pred_region
      %s253 = ssub.s32 128, 128
      %254 = vsyncadd [#allocation5], %s253
      %s256 = sshll.u32 [#allocation9], 4
      %s257 = int_to_ptr.vmem [resolvable:$true] %s256
      %259 = dma.vmem_to_hbm [thread:$0]  %s257, 128, %s5, [#allocation5]
    $region45: #{tpu_custom_call.1} parent=1 // pred_fallthru
      _
    // Predicated region
    $region46: #{tpu_custom_call.1} parent=1 // pred_check
      _
    $region47: #{tpu_custom_call.1} parent=1 // pred_check_branch
      %261 = sbr.rel (0) target = $region49
    $region48: #{tpu_custom_call.1} parent=1 // pred_region
      %262 = dma.done [#allocation5], 128
    $region49: #{tpu_custom_call.1} parent=1 // pred_fallthru
      _
    %263 = vsyncpa [#allocation4], 1
    %264 = vsyncpa [#allocation7], 1
    %265 = vsyncpa [#allocation5], 1

// kernel: tpu_custom_call.1
$region0: #{tpu_custom_call.1}
  #allocation0 [shape = 'u32[]', space=smem, size = 0x4, offset = 0x4, fixed_abs, tag = 'smem constant byte address 0x4 - core index']
  #allocation1 [shape = 'u32[144,128]{1,0:T(1,128)}', space=vmem, size = 0x12000, scoped, tag = 'internal scratch']
  #allocation2 [shape = 'f32[8,128]{1,0:T(8,128)}', space=vmem, size = 0x1000, scoped, tag = 'scratch operand']
  %s0 = inlined_call_operand.hbm [shape: f32[8,32], index: 0, kind: input, shape index: {}]
  %s1 = inlined_call_operand.hbm [shape: f32[32,64], index: 1, kind: input, shape index: {}]
  %s2 = inlined_call_operand.vmem [shape: f32[1,64], index: 2, kind: input, shape index: {}]
  %s3 = inlined_call_operand.hbm [shape: f32[64,128], index: 3, kind: input, shape index: {}]
  %s4 = inlined_call_operand.vmem [shape: f32[1,128], index: 4, kind: input, shape index: {}]
  %s5 = inlined_call_operand.hbm [shape: f32[8,128], index: 5, kind: output, shape index: {}]
  %s6 = sld [smem:[#allocation0]]
  $region50: #{tpu_custom_call.1} parent=0
    _
  %s8 = ssub.s32 1, %s6
  %s9 = scalar_select 0, %s8, %s6
  $region1: #{tpu_custom_call.1} parent=0
    #allocation3 [shape = 'u8[4096]{0}', space=vmem, size = 0x1000, scoped, tag = 'input window, operand 0, single buffered']
    #allocation4 [shape = 's32[1]{0}', space=sflag, size = 0x4, scoped, tag = 'scoped memory for tpu_custom_call.1']
    #allocation5 [shape = 's32[1]{0}', space=sflag, size = 0x4, scoped, tag = 'scoped memory for tpu_custom_call.1']
    #allocation6 [shape = 'u8[16384]{0}', space=vmem, size = 0x4000, scoped, tag = 'input window, operand 1, single buffered']
    #allocation7 [shape = 's32[1]{0}', space=sflag, size = 0x4, scoped, tag = 'scoped memory for tpu_custom_call.1']
    #allocation8 [shape = 'u8[32768]{0}', space=vmem, size = 0x8000, scoped, tag = 'input window, operand 3, single buffered']
    #allocation9 [shape = 'u8[4096]{0}', space=vmem, size = 0x1000, scoped, tag = 'output window, operand 0, single buffered']
    %10 = vsyncpa [#allocation4], 0
    %11 = vsyncpa [#allocation7], 0
    %12 = vsyncpa [#allocation5], 0
    // Predicated region
    $region2: #{tpu_custom_call.1} parent=1 // pred_check
      _
    $region3: #{tpu_custom_call.1} parent=1 // pred_check_branch
      %14 = sbr.rel (0) target = $region5
    $region4: #{tpu_custom_call.1} parent=1 // pred_region
      %s16 = ssub.s32 128, 128
      %17 = vsyncadd [#allocation4], %s16
      %s19 = sshll.u32 [#allocation3], 4
      %s20 = int_to_ptr.vmem [resolvable:$true] %s19
      %22 = dma.hbm_to_vmem [thread:$0]  %s0, 128, %s20, [#allocation4]
    $region5: #{tpu_custom_call.1} parent=1 // pred_fallthru
      _
    // Predicated region
    $region6: #{tpu_custom_call.1} parent=1 // pred_check
      _
    $region7: #{tpu_custom_call.1} parent=1 // pred_check_branch
      %24 = sbr.rel (0) target = $region9
    $region8: #{tpu_custom_call.1} parent=1 // pred_region
      %s26 = ssub.s32 512, 512
      %27 = vsyncadd [#allocation7], %s26
      %s28 = sshll.u32 [#allocation6], 4
      %s29 = int_to_ptr.vmem [resolvable:$true] %s28
      %34 = dma.hbm_to_vmem [thread:$0]  %s1, 512, %s29, [#allocation7], 128, 128, 8
    $region9: #{tpu_custom_call.1} parent=1 // pred_fallthru
      _
    // Predicated region
    $region10: #{tpu_custom_call.1} parent=1 // pred_check
      _
    $region11: #{tpu_custom_call.1} parent=1 // pred_check_branch
      %36 = sbr.rel (0) target = $region13
    $region12: #{tpu_custom_call.1} parent=1 // pred_region
      _
    $region13: #{tpu_custom_call.1} parent=1 // pred_fallthru
      _
    // Predicated region
    $region14: #{tpu_custom_call.1} parent=1 // pred_check
      _
    $region15: #{tpu_custom_call.1} parent=1 // pred_check_branch
      %38 = sbr.rel (0) target = $region17
    $region16: #{tpu_custom_call.1} parent=1 // pred_region
      %s40 = ssub.s32 1024, 1024
      %41 = vsyncadd [#allocation7], %s40
      %s42 = sshll.u32 [#allocation8], 4
      %s43 = int_to_ptr.vmem [resolvable:$true] %s42
      %48 = dma.hbm_to_vmem [thread:$0]  %s3, 1024, %s43, [#allocation7], 128, 128, 8
    $region17: #{tpu_custom_call.1} parent=1 // pred_fallthru
      _
    // Predicated region
    $region18: #{tpu_custom_call.1} parent=1 // pred_check
      _
    $region19: #{tpu_custom_call.1} parent=1 // pred_check_branch
      %50 = sbr.rel (0) target = $region21
    $region20: #{tpu_custom_call.1} parent=1 // pred_region
      _
    $region21: #{tpu_custom_call.1} parent=1 // pred_fallthru
      _
    // Predicated region
    $region22: #{tpu_custom_call.1} parent=1 // pred_check
      _
    $region23: #{tpu_custom_call.1} parent=1 // pred_check_branch
      %52 = sbr.rel (0) target = $region25
    $region24: #{tpu_custom_call.1} parent=1 // pred_region
      %53 = dma.done [#allocation4], 128
    $region25: #{tpu_custom_call.1} parent=1 // pred_fallthru
      _
    // Predicated region
    $region26: #{tpu_custom_call.1} parent=1 // pred_check
      _
    $region27: #{tpu_custom_call.1} parent=1 // pred_check_branch
      %55 = sbr.rel (0) target = $region29
    $region28: #{tpu_custom_call.1} parent=1 // pred_region
      %56 = dma.done [#allocation7], 512
    $region29: #{tpu_custom_call.1} parent=1 // pred_fallthru
      _
    // Predicated region
    $region30: #{tpu_custom_call.1} parent=1 // pred_check
      _
    $region31: #{tpu_custom_call.1} parent=1 // pred_check_branch
      %58 = sbr.rel (0) target = $region33
    $region32: #{tpu_custom_call.1} parent=1 // pred_region
      %59 = dma.done [#allocation7], 1024
    $region33: #{tpu_custom_call.1} parent=1 // pred_fallthru
      _
    %p60 = scmp.eq.s32.totalorder 0, 0
    // Predicated region
    $region34: #{tpu_custom_call.1} parent=1 // pred_check
      %p61 = pneg %p60
    $region35: #{tpu_custom_call.1} parent=1 // pred_check_branch
      %63 = sbr.rel (%p61) target = $region37
    $region36: #{tpu_custom_call.1} parent=1 // pred_region
      %64 = vst [vmem:[#allocation2] sm:$0xff] 0.0
    $region37: #{tpu_custom_call.1} parent=1 // pred_fallthru
      _
    %v65 = vld [vmem:[#allocation3] sm:$0xff]
    %v66 = vld [vmem:[#allocation6] sm:$0xff]
    %v67 = vld [vmem:[#allocation6 + $0x8] sm:$0xff]
    %v68 = vld [vmem:[#allocation6 + $0x10] sm:$0xff]
    %v69 = vld [vmem:[#allocation6 + $0x18] sm:$0xff]
    %v70 = vld [vmem:[%s2] sm:$0x1]
    %v72 = vlaneseq
    %v73 = vshrl.u32 %v72, 7
    %v74 = vsub.s32 0, %v73
    %v75 = vrot.slane %v70, %v74
    %vm77 = vcmask 261120
    %v79 = vsel %vm77, %v65, 0
    %81 = vmatprep.subr.mxu0 0.0
    %82 = vmatpush1.msra.mxu0 %v66
    %83 = vmatprep.subr.mxu0 0.0
    %84 = vmatpush1.msra.mxu0 %v67
    %85 = vmatprep.subr.mxu0 0.0
    %86 = vmatpush1.msra.mxu0 %v68
    %87 = vmatprep.subr.mxu0 0.0
    %88 = vmatpush1.msra.mxu0 %v69
    %89 = vmatprep.subr.mxu0 0.0
    %90 = vmatpush1.msra.mxu0 0.0
    %91 = vmatprep.subr.mxu0 0.0
    %92 = vmatpush1.msra.mxu0 0.0
    %93 = vmatprep.subr.mxu0 0.0
    %94 = vmatpush1.msra.mxu0 0.0
    %95 = vmatprep.subr.mxu0 0.0
    %96 = vmatpush1.msra.mxu0 0.0
    %97 = vmatprep.subr.mxu0 0.0
    %98 = vmatpush1.msra.mxu0 0.0
    %99 = vmatprep.subr.mxu0 0.0
    %100 = vmatpush1.msra.mxu0 0.0
    %101 = vmatprep.subr.mxu0 0.0
    %102 = vmatpush1.msra.mxu0 0.0
    %103 = vmatprep.subr.mxu0 0.0
    %104 = vmatpush1.msra.mxu0 0.0
    %105 = vmatprep.subr.mxu0 0.0
    %106 = vmatpush1.msra.mxu0 0.0
    %107 = vmatprep.subr.mxu0 0.0
    %108 = vmatpush1.msra.mxu0 0.0
    %109 = vmatprep.subr.mxu0 0.0
    %110 = vmatpush1.msra.mxu0 0.0
    %111 = vmatprep.subr.mxu0 0.0
    %112 = vmatpush1.msra.mxu0 0.0
    %113 = vmatprep.subr.mxu0 0.0
    %114 = vmatpush1.msra.mxu0 0.0
    %115 = vmatprep.subr.mxu0 0.0
    %116 = vmatpush1.msra.mxu0 0.0
    %117 = vmatprep.subr.mxu0 0.0
    %118 = vmatpush1.msra.mxu0 0.0
    %119 = vmatprep.subr.mxu0 0.0
    %120 = vmatpush1.msra.mxu0 0.0
    %121 = vmatprep.subr.mxu0 0.0
    %122 = vmatpush1.msra.mxu0 0.0
    %123 = vmatprep.subr.mxu0 0.0
    %124 = vmatpush1.msra.mxu0 0.0
    %125 = vmatprep.subr.mxu0 0.0
    %126 = vmatpush1.msra.mxu0 0.0
    %127 = vmatprep.subr.mxu0 0.0
    %128 = vmatpush1.msra.mxu0 0.0
    %129 = vmatprep.subr.mxu0 0.0
    %130 = vmatpush1.msra.mxu0 0.0
    %131 = vmatprep.subr.mxu0 0.0
    %132 = vmatpush1.msra.mxu0 0.0
    %133 = vmatprep.subr.mxu0 0.0
    %134 = vmatpush1.msra.mxu0 0.0
    %135 = vmatprep.subr.mxu0 0.0
    %136 = vmatpush1.msra.mxu0 0.0
    %137 = vmatprep.subr.mxu0 0.0
    %138 = vmatpush1.msra.mxu0 0.0
    %139 = vmatprep.subr.mxu0 0.0
    %140 = vmatpush1.msra.mxu0 0.0
    %141 = vmatprep.subr.mxu0 0.0
    %142 = vmatpush1.msra.mxu0 0.0
    %143 = vmatprep.subr.mxu0 0.0
    %144 = vmatpush1.msra.mxu0 0.0
    %145 = vmatprep.mubr.f32.mxu0 0.0
    %146 = vmatmul.mubr.f32.gmra.mrb[0].mxu0 %v79
    %v147 = vpop.f32.mrb[0].mxu0
    %v148 = vadd.f32 %v75, %v147
    %v149 = vpop.f32.mrb[0].mxu0
    %150 = vdwg.mxu0
    %v151 = vmax.f32 %v148, 0.0
    %v152 = vld [vmem:[#allocation2] sm:$0xff]
    %v153 = vld [vmem:[#allocation8] sm:$0xff]
    %v154 = vld [vmem:[#allocation8 + $0x8] sm:$0xff]
    %v155 = vld [vmem:[#allocation8 + $0x10] sm:$0xff]
    %v156 = vld [vmem:[#allocation8 + $0x18] sm:$0xff]
    %v157 = vld [vmem:[#allocation8 + $0x20] sm:$0xff]
    %v158 = vld [vmem:[#allocation8 + $0x28] sm:$0xff]
    %v159 = vld [vmem:[#allocation8 + $0x30] sm:$0xff]
    %v160 = vld [vmem:[#allocation8 + $0x38] sm:$0xff]
    %vm161 = vcmask 523264
    %v163 = vsel %vm161, %v151, 0
    %165 = vmatprep.subr.mxu0 0.0
    %166 = vmatpush1.msra.mxu0 %v153
    %167 = vmatprep.subr.mxu0 0.0
    %168 = vmatpush1.msra.mxu0 %v154
    %169 = vmatprep.subr.mxu0 0.0
    %170 = vmatpush1.msra.mxu0 %v155
    %171 = vmatprep.subr.mxu0 0.0
    %172 = vmatpush1.msra.mxu0 %v156
    %173 = vmatprep.subr.mxu0 0.0
    %174 = vmatpush1.msra.mxu0 %v157
    %175 = vmatprep.subr.mxu0 0.0
    %176 = vmatpush1.msra.mxu0 %v158
    %177 = vmatprep.subr.mxu0 0.0
    %178 = vmatpush1.msra.mxu0 %v159
    %179 = vmatprep.subr.mxu0 0.0
    %180 = vmatpush1.msra.mxu0 %v160
    %181 = vmatprep.subr.mxu0 0.0
    %182 = vmatpush1.msra.mxu0 0.0
    %183 = vmatprep.subr.mxu0 0.0
    %184 = vmatpush1.msra.mxu0 0.0
    %185 = vmatprep.subr.mxu0 0.0
    %186 = vmatpush1.msra.mxu0 0.0
    %187 = vmatprep.subr.mxu0 0.0
    %188 = vmatpush1.msra.mxu0 0.0
    %189 = vmatprep.subr.mxu0 0.0
    %190 = vmatpush1.msra.mxu0 0.0
    %191 = vmatprep.subr.mxu0 0.0
    %192 = vmatpush1.msra.mxu0 0.0
    %193 = vmatprep.subr.mxu0 0.0
    %194 = vmatpush1.msra.mxu0 0.0
    %195 = vmatprep.subr.mxu0 0.0
    %196 = vmatpush1.msra.mxu0 0.0
    %197 = vmatprep.subr.mxu0 0.0
    %198 = vmatpush1.msra.mxu0 0.0
    %199 = vmatprep.subr.mxu0 0.0
    %200 = vmatpush1.msra.mxu0 0.0
    %201 = vmatprep.subr.mxu0 0.0
    %202 = vmatpush1.msra.mxu0 0.0
    %203 = vmatprep.subr.mxu0 0.0
    %204 = vmatpush1.msra.mxu0 0.0
    %205 = vmatprep.subr.mxu0 0.0
    %206 = vmatpush1.msra.mxu0 0.0
    %207 = vmatprep.subr.mxu0 0.0
    %208 = vmatpush1.msra.mxu0 0.0
    %209 = vmatprep.subr.mxu0 0.0
    %210 = vmatpush1.msra.mxu0 0.0
    %211 = vmatprep.subr.mxu0 0.0
    %212 = vmatpush1.msra.mxu0 0.0
    %213 = vmatprep.subr.mxu0 0.0
    %214 = vmatpush1.msra.mxu0 0.0
    %215 = vmatprep.subr.mxu0 0.0
    %216 = vmatpush1.msra.mxu0 0.0
    %217 = vmatprep.subr.mxu0 0.0
    %218 = vmatpush1.msra.mxu0 0.0
    %219 = vmatprep.subr.mxu0 0.0
    %220 = vmatpush1.msra.mxu0 0.0
    %221 = vmatprep.subr.mxu0 0.0
    %222 = vmatpush1.msra.mxu0 0.0
    %223 = vmatprep.subr.mxu0 0.0
    %224 = vmatpush1.msra.mxu0 0.0
    %225 = vmatprep.subr.mxu0 0.0
    %226 = vmatpush1.msra.mxu0 0.0
    %227 = vmatprep.subr.mxu0 0.0
    %228 = vmatpush1.msra.mxu0 0.0
    %229 = vmatprep.mubr.f32.mxu0 0.0
    %230 = vmatmul.mubr.f32.gmra.mrb[0].mxu0 %v163
    %v231 = vpop.f32.mrb[0].mxu0
    %v232 = vadd.f32 0.0, %v231
    %v233 = vpop.f32.mrb[0].mxu0
    %234 = vdwg.mxu0
    %v235 = vadd.f32 %v152, %v232
    %236 = vst [vmem:[#allocation2] sm:$0xff] %v235
    // Predicated region
    $region38: #{tpu_custom_call.1} parent=1 // pred_check
      %p237 = pneg %p60
    $region39: #{tpu_custom_call.1} parent=1 // pred_check_branch
      %239 = sbr.rel (%p237) target = $region41
    $region40: #{tpu_custom_call.1} parent=1 // pred_region
      %v240 = vld [vmem:[#allocation2] sm:$0xff]
      %v241 = vld [vmem:[%s4] sm:$0x1]
      %v243 = vlaneseq
      %v244 = vshrl.u32 %v243, 7
      %v245 = vsub.s32 0, %v244
      %v246 = vrot.slane %v241, %v245
      %v248 = vadd.f32 %v240, %v246
      %249 = vst [vmem:[#allocation9] sm:$0xff] %v248
    $region41: #{tpu_custom_call.1} parent=1 // pred_fallthru
      _
    // Predicated region
    $region42: #{tpu_custom_call.1} parent=1 // pred_check
      _
    $region43: #{tpu_custom_call.1} parent=1 // pred_check_branch
      %251 = sbr.rel (0) target = $region45
    $region44: #{tpu_custom_call.1} parent=1 // pred_region
      %s253 = ssub.s32 128, 128
      %254 = vsyncadd [#allocation5], %s253
      %s256 = sshll.u32 [#allocation9], 4
      %s257 = int_to_ptr.vmem [resolvable:$true] %s256
      %259 = dma.vmem_to_hbm [thread:$0]  %s257, 128, %s5, [#allocation5]
    $region45: #{tpu_custom_call.1} parent=1 // pred_fallthru
      _
    // Predicated region
    $region46: #{tpu_custom_call.1} parent=1 // pred_check
      _
    $region47: #{tpu_custom_call.1} parent=1 // pred_check_branch
      %261 = sbr.rel (0) target = $region49
    $region48: #{tpu_custom_call.1} parent=1 // pred_region
      %262 = dma.done [#allocation5], 128
    $region49: #{tpu_custom_call.1} parent=1 // pred_fallthru
      _
    %263 = vsyncpa [#allocation4], 1
    %264 = vsyncpa [#allocation7], 1
    %265 = vsyncpa [#allocation5], 1

</llo_original>
